<compile_context>
chip_gen: v6e
topology: v6e:2x2x1
jax: 0.10.0
libtpu: 0.0.40
codegen_flags: <defaults>
</compile_context>

<pallas_src>
import functools

import jax
import jax.numpy as jnp
from jax.experimental import pallas as pl
from jax.experimental.pallas import tpu as pltpu


LANE = 128
ROW_ALIGN = 16          # sublane alignment (covers bf16 (16,128) packing)
MAX_BATCH_TILE = 512    # largest single batch block (huge VMEM headroom here)


def _round_up(x, m):
    return ((x + m - 1) // m) * m


def _detect_num_tensorcores():
    # v7x has 2 TensorCores per chip; v5e / v6e have 1.  Only used to decide
    # whether to split the batch grid so both cores get work.
    try:
        kind = jax.devices()[0].device_kind.lower()
    except Exception:
        return 1
    return 2 if ("v7" in kind or "7x" in kind) else 1


_NUM_TC = _detect_num_tensorcores()


# ----------------------------------------------------------------------------
# Kernels (patch-embed already folded into the head weights at prep time)
# ----------------------------------------------------------------------------
def _linear_kernel(x_ref, w_ref, b_ref, o_ref):
    # x: [tb, Dp] bf16   w: [Dp, Op] bf16   b: [1, Op] f32   o: [tb, Op] f32
    o_ref[...] = (
        jnp.dot(x_ref[...], w_ref[...], preferred_element_type=jnp.float32)
        + b_ref[...]
    )


def _ffn_kernel(x_ref, w1_ref, b1_ref, w2_ref, b2_ref, o_ref):
    # Linear -> ReLU -> Linear, with the patch-embed folded into w1 / b1.
    h = (
        jnp.dot(x_ref[...], w1_ref[...], preferred_element_type=jnp.float32)
        + b1_ref[...]
    )
    h = jnp.maximum(h, 0.0).astype(w2_ref.dtype)
    o_ref[...] = (
        jnp.dot(h, w2_ref[...], preferred_element_type=jnp.float32) + b2_ref[...]
    )


# ----------------------------------------------------------------------------
# One-time parameter prep (hoisted out of the forward)
# ----------------------------------------------------------------------------
def prepare_params(params, encoder_type="encoder_only", patch=8,
                   compute_dtype=jnp.bfloat16):
    """Permute patch-embed rows to channel-major, fold the patch-embed into the
    projection head (valid: no nonlinearity in between), pad lane dims to
    multiples of 128, cast matmul weights to bf16 (biases stay fp32)."""
    ph = pw = patch
    dp = 3 * ph * pw
    hidden = params["wp"].shape[1]
    # original row order (ph, pw, c)  ->  (c, ph, pw) row order
    wp = (params["wp"].reshape(ph, pw, 3, hidden)
          .transpose(2, 0, 1, 3).reshape(dp, hidden))
    bp = params["bp"]

    if encoder_type in ("encoder_ffn", "tokenizer_ffn"):
        f = params["w1"].shape[1]
        out_dim = params["w2"].shape[1]
        fp_ = _round_up(f, LANE)
        op = _round_up(out_dim, LANE)
        w1c = wp @ params["w1"]                    # [dp, f]  fold patch-embed
        b1c = bp @ params["w1"] + params["b1"]     # [1, f]
        weights = {
            "w1c": jnp.pad(w1c, ((0, 0), (0, fp_ - f))).astype(compute_dtype),
            "b1c": jnp.pad(b1c, ((0, 0), (0, fp_ - f))).astype(jnp.float32),
            "w2": jnp.pad(params["w2"], ((0, fp_ - f), (0, op - out_dim))
                          ).astype(compute_dtype),
            "b2": jnp.pad(params["b2"], ((0, 0), (0, op - out_dim))
                          ).astype(jnp.float32),
        }
    else:  # 'encoder_only' (default) and everything else: single Linear head
        out_dim = params["w"].shape[1]
        op = _round_up(out_dim, LANE)
        wc = wp @ params["w"]                      # [dp, out_dim]
        bc = bp @ params["w"] + params["b"]        # [1, out_dim]
        weights = {
            "wc": jnp.pad(wc, ((0, 0), (0, op - out_dim))).astype(compute_dtype),
            "bc": jnp.pad(bc, ((0, 0), (0, op - out_dim))).astype(jnp.float32),
        }
    return weights, out_dim


# ----------------------------------------------------------------------------
# Forward (jitted: image slice + spatial mean + pad fuse into one XLA pass)
# ----------------------------------------------------------------------------
@functools.partial(jax.jit, static_argnames=("out_dim", "encoder_type", "patch"))
def vision_encoder_forward(image, weights, out_dim, encoder_type="encoder_only",
                           patch=8):
    """image: [B, C, H, W] float32 (NCHW).  Returns [B, out_dim] float32."""
    # TODO(synk): the HuggingFace `processor` (resize + mean/std normalization)
    # and the pretrained `vision_model` backbone have no in-script equivalent;
    # they are replaced by a deterministic linear patch-embed + mean-pool
    # stand-in producing `pooler_output`.  The mean/patch-embed fold below is
    # only valid because that stand-in is purely linear before pooling.
    B, C, H, W = image.shape
    x = image[:, :3, :, :]
    ph = pw = patch
    nh, nw = H // ph, W // pw
    dp = 3 * ph * pw

    # Mean over patch positions, produced directly in channel-major (c, ph, pw)
    # row order to match the permuted, folded weights (no transpose needed).
    xm = x.reshape(B, 3, nh, ph, nw, pw).mean(axis=(2, 4)).reshape(B, dp)

    # Batch tiling: pad B up to a multiple of the tile so every tile is dense
    # (no dropped rows, unmasked stores).  Split across 2 TCs on v7x.
    b8 = _round_up(B, ROW_ALIGN)
    if _NUM_TC >= 2 and b8 >= 2 * ROW_ALIGN:
        tb = _round_up(pl.cdiv(b8, _NUM_TC), ROW_ALIGN)
    else:
        tb = min(b8, MAX_BATCH_TILE)
    bp_rows = _round_up(b8, tb)
    grid = (bp_rows // tb,)

    xm = jnp.pad(xm, ((0, bp_rows - B), (0, 0))).astype(jnp.bfloat16)

    row = lambda i: (i, 0)       # batch-tiled activations / output
    bcast = lambda i: (0, 0)     # grid-invariant weights / biases
    cparams = pltpu.CompilerParams(dimension_semantics=("parallel",))

    if encoder_type in ("encoder_ffn", "tokenizer_ffn"):
        w1c, b1c, w2, b2 = (weights["w1c"], weights["b1c"],
                            weights["w2"], weights["b2"])
        fp_ = w1c.shape[1]
        op = w2.shape[1]
        out_p = pl.pallas_call(
            _ffn_kernel,
            out_shape=jax.ShapeDtypeStruct((bp_rows, op), jnp.float32),
            grid=grid,
            in_specs=[
                pl.BlockSpec((tb, dp), row),
                pl.BlockSpec((dp, fp_), bcast),
                pl.BlockSpec((1, fp_), bcast),
                pl.BlockSpec((fp_, op), bcast),
                pl.BlockSpec((1, op), bcast),
            ],
            out_specs=pl.BlockSpec((tb, op), row),
            compiler_params=cparams,
        )(xm, w1c, b1c, w2, b2)
    else:
        wc, bc = weights["wc"], weights["bc"]
        op = wc.shape[1]
        out_p = pl.pallas_call(
            _linear_kernel,
            out_shape=jax.ShapeDtypeStruct((bp_rows, op), jnp.float32),
            grid=grid,
            in_specs=[
                pl.BlockSpec((tb, dp), row),
                pl.BlockSpec((dp, op), bcast),
                pl.BlockSpec((1, op), bcast),
            ],
            out_specs=pl.BlockSpec((tb, op), row),
            compiler_params=cparams,
        )(xm, wc, bc)

    return out_p[:B, :out_dim]


# ----------------------------------------------------------------------------
# Pure-JAX reference (original, un-folded, fp32) for the correctness check
# ----------------------------------------------------------------------------
def vision_encoder_reference(image, params, encoder_type="encoder_only", patch=8):
    B, C, H, W = image.shape
    x = image[:, :3, :, :]
    ph = pw = patch
    nh, nw = H // ph, W // pw
    patches = x.reshape(B, 3, nh, ph, nw, pw)
    patches = jnp.transpose(patches, (0, 2, 4, 3, 5, 1)).reshape(
        B, nh * nw, ph * pw * 3
    )
    tok = jnp.einsum("bpd,dh->bph", patches, params["wp"]) + params["bp"]
    pooled = jnp.mean(tok, axis=1)
    if encoder_type in ("encoder_ffn", "tokenizer_ffn"):
        h = jnp.maximum(pooled @ params["w1"] + params["b1"], 0.0)
        return h @ params["w2"] + params["b2"]
    return pooled @ params["w"] + params["b"]


def init_params(key, patch_dim, visual_feature_dim, out_dim, ffn_hidden=512):
    ks = jax.random.split(key, 4)
    s = 0.02
    return {
        # patch-embed stand-in for the vision backbone
        "wp": s * jax.random.normal(ks[0], (patch_dim, visual_feature_dim), jnp.float32),
        "bp": jnp.zeros((1, visual_feature_dim), jnp.float32),
        # encoder_only projection: Linear(visual_feature_dim, out_dim)
        "w": s * jax.random.normal(ks[1], (visual_feature_dim, out_dim), jnp.float32),
        "b": jnp.zeros((1, out_dim), jnp.float32),
        # encoder_ffn projection: Linear(vfd, 512) -> ReLU -> Linear(512, out_dim)
        "w1": s * jax.random.normal(ks[2], (visual_feature_dim, ffn_hidden), jnp.float32),
        "b1": jnp.zeros((1, ffn_hidden), jnp.float32),
        "w2": s * jax.random.normal(ks[3], (ffn_hidden, out_dim), jnp.float32),
        "b2": jnp.zeros((1, out_dim), jnp.float32),
    }


if __name__ == "__main__":
    key = jax.random.PRNGKey(0)
    k_img, k_par = jax.random.split(key)

    # small shapes consistent with the module's forward
    B, C, H, W = 2, 4, 16, 16       # image has >=3 channels; forward keeps first 3
    patch = 8
    visual_feature_dim = 32         # stand-in for model.config.hidden_size
    out_dim = 64                    # VisionEncoder out_dim (small)

    image = jax.random.normal(k_img, (B, C, H, W), jnp.float32)
    params = init_params(k_par, patch_dim=3 * patch * patch,
                         visual_feature_dim=visual_feature_dim, out_dim=out_dim)

    ok = True
    for enc_type in ("encoder_only", "encoder_ffn"):
        weights, od = prepare_params(params, encoder_type=enc_type, patch=patch)
        out = vision_encoder_forward(image, weights, od, encoder_type=enc_type,
                                     patch=patch)
        out = jax.block_until_ready(out)
        ref = vision_encoder_reference(image, params, encoder_type=enc_type,
                                       patch=patch)
        ok &= out.shape == (B, out_dim)
        # bf16 matmul operands (fp32 accumulation) -> loosened tolerance vs the
        # fp32 reference.
        ok &= bool(jnp.allclose(out, ref, atol=1e-3, rtol=2e-2))

    if ok:
        print("KERNEL_OK")
    else:
        print("KERNEL_MISMATCH")
</pallas_src>

<mosaic_0001>
module attributes {stable_mosaic.version = 11 : i64} {
  func.func @_linear_kernel(%arg0: i32, %arg1: memref<16x192xbf16, #tpu.memory_space<vmem>>, %arg2: memref<192x128xbf16, #tpu.memory_space<vmem>>, %arg3: memref<1x128xf32, #tpu.memory_space<vmem>>, %arg4: memref<16x128xf32, #tpu.memory_space<vmem>>) attributes {dimension_semantics = [#tpu.dimension_semantics<parallel>], iteration_bounds = array<i64: 1>, scalar_prefetch = 0 : i64, scratch_operands = 0 : i64, tpu.core_type = #tpu.core_type<tc>, window_params = [{transform_indices = @transform_0, window_bounds = array<i64: 16, 192>}, {pipeline_mode = #tpu.pipeline_mode<synchronous>, transform_indices = @transform_1, window_bounds = array<i64: 192, 128>}, {pipeline_mode = #tpu.pipeline_mode<synchronous>, transform_indices = @transform_2, window_bounds = array<i64: 1, 128>}, {transform_indices = @transform_3, window_bounds = array<i64: 16, 128>}]} {
    %c0 = arith.constant 0 : index
    %c0_0 = arith.constant 0 : index
    %0 = vector.load %arg1[%c0, %c0_0] : memref<16x192xbf16, #tpu.memory_space<vmem>>, vector<16x192xbf16>
    %c0_1 = arith.constant 0 : index
    %c0_2 = arith.constant 0 : index
    %1 = vector.load %arg2[%c0_1, %c0_2] : memref<192x128xbf16, #tpu.memory_space<vmem>>, vector<192x128xbf16>
    %cst = arith.constant dense<0.000000e+00> : vector<16x128xf32>
    %2 = tpu.matmul %0, %1, %cst {dimension_numbers = #tpu.dot_dimension_numbers<[1], [0], [0], [1], [0, 0, 1, 1], [], []>} : vector<16x192xbf16>, vector<192x128xbf16>, vector<16x128xf32> -> vector<16x128xf32>
    %c0_3 = arith.constant 0 : index
    %c0_4 = arith.constant 0 : index
    %3 = vector.load %arg3[%c0_3, %c0_4] : memref<1x128xf32, #tpu.memory_space<vmem>>, vector<1x128xf32>
    %4 = vector.broadcast %3 : vector<1x128xf32> to vector<16x128xf32>
    %5 = arith.addf %2, %4 : vector<16x128xf32>
    %c0_5 = arith.constant 0 : index
    %c0_6 = arith.constant 0 : index
    %6 = vector.load %arg4[%c0_5, %c0_6] : memref<16x128xf32, #tpu.memory_space<vmem>>, vector<16x128xf32>
    tpu.vector_store %arg4[%c0_5, %c0_6], %5 {strides = array<i32>} : memref<16x128xf32, #tpu.memory_space<vmem>>, vector<16x128xf32>,
    return
  }
  func.func @transform_0(%arg0: i32) -> (i32, i32) {
    %c0_i32 = arith.constant 0 : i32
    %c0_i32_0 = arith.constant 0 : i32
    return %arg0, %c0_i32 : i32, i32
  }
  func.func @transform_1(%arg0: i32) -> (i32, i32) {
    %c0_i32 = arith.constant 0 : i32
    %c0_i32_0 = arith.constant 0 : i32
    %c0_i32_1 = arith.constant 0 : i32
    return %c0_i32, %c0_i32_0 : i32, i32
  }
  func.func @transform_2(%arg0: i32) -> (i32, i32) {
    %c0_i32 = arith.constant 0 : i32
    %c0_i32_0 = arith.constant 0 : i32
    %c0_i32_1 = arith.constant 0 : i32
    return %c0_i32, %c0_i32_0 : i32, i32
  }
  func.func @transform_3(%arg0: i32) -> (i32, i32) {
    %c0_i32 = arith.constant 0 : i32
    %c0_i32_0 = arith.constant 0 : i32
    return %arg0, %c0_i32 : i32, i32
  }
}

</mosaic_0001>

<llo_original>
// kernel: vision_encoder_forward.1
$region0: #{vision_encoder_forward.1}
  #allocation0 [shape = 'u32[]', space=smem, size = 0x4, offset = 0x4, fixed_abs, tag = 'smem constant byte address 0x4 - core index']
  #allocation1 [shape = 'u32[144,128]{1,0:T(1,128)}', space=vmem, size = 0x12000, scoped, tag = 'internal scratch']
  %s0 = inlined_call_operand.vmem [shape: bf16[16,192], index: 0, kind: input, shape index: {}]
  %s1 = inlined_call_operand.vmem [shape: bf16[192,128], index: 1, kind: input, shape index: {}]
  %s2 = inlined_call_operand.vmem [shape: f32[1,128], index: 2, kind: input, shape index: {}]
  %s3 = inlined_call_operand.vmem [shape: f32[16,128], index: 3, kind: output, shape index: {}]
  %s4 = sld [smem:[#allocation0]]
  $region22: #{vision_encoder_forward.1} parent=0
    _
  %s6 = ssub.s32 1, %s4
  %s7 = scalar_select 0, %s6, %s4
  // Predicated region
  $region2: #{vision_encoder_forward.1} parent=0 // pred_check
    _
  $region3: #{vision_encoder_forward.1} parent=0 // pred_check_branch
    %9 = sbr.rel (0) target = $region5
  $region4: #{vision_encoder_forward.1} parent=0 // pred_region
    _
  $region5: #{vision_encoder_forward.1} parent=0 // pred_fallthru
    _
  // Predicated region
  $region6: #{vision_encoder_forward.1} parent=0 // pred_check
    _
  $region7: #{vision_encoder_forward.1} parent=0 // pred_check_branch
    %11 = sbr.rel (0) target = $region9
  $region8: #{vision_encoder_forward.1} parent=0 // pred_region
    _
  $region9: #{vision_encoder_forward.1} parent=0 // pred_fallthru
    _
  // Predicated region
  $region10: #{vision_encoder_forward.1} parent=0 // pred_check
    _
  $region11: #{vision_encoder_forward.1} parent=0 // pred_check_branch
    %13 = sbr.rel (0) target = $region13
  $region12: #{vision_encoder_forward.1} parent=0 // pred_region
    _
  $region13: #{vision_encoder_forward.1} parent=0 // pred_fallthru
    _
  %v15 = vld [vmem:[%s0] sm:$0xff]
  %v16 = vld [vmem:[%s0 + $0x8] sm:$0xff]
  %v17 = vld [vmem:[%s1] sm:$0xf]
  %v18 = vld [vmem:[%s1 + $0x4] sm:$0xf]
  %v19 = vld [vmem:[%s1 + $0x8] sm:$0xf]
  %v20 = vld [vmem:[%s1 + $0xc] sm:$0xf]
  %v21 = vld [vmem:[%s1 + $0x10] sm:$0xf]
  %v22 = vld [vmem:[%s1 + $0x14] sm:$0xf]
  %v23 = vld [vmem:[%s1 + $0x18] sm:$0xf]
  %v24 = vld [vmem:[%s1 + $0x1c] sm:$0xf]
  %v25 = vld [vmem:[%s1 + $0x20] sm:$0xf]
  %v26 = vld [vmem:[%s1 + $0x24] sm:$0xf]
  %v27 = vld [vmem:[%s1 + $0x28] sm:$0xf]
  %v28 = vld [vmem:[%s1 + $0x2c] sm:$0xf]
  %v29 = vld [vmem:[%s1 + $0x30] sm:$0xf]
  %v30 = vld [vmem:[%s1 + $0x34] sm:$0xf]
  %v31 = vld [vmem:[%s1 + $0x38] sm:$0xf]
  %v32 = vld [vmem:[%s1 + $0x3c] sm:$0xf]
  %v33 = vld [vmem:[%s1 + $0x40] sm:$0xf]
  %v34 = vld [vmem:[%s1 + $0x44] sm:$0xf]
  %v35 = vld [vmem:[%s1 + $0x48] sm:$0xf]
  %v36 = vld [vmem:[%s1 + $0x4c] sm:$0xf]
  %v37 = vld [vmem:[%s1 + $0x50] sm:$0xf]
  %v38 = vld [vmem:[%s1 + $0x54] sm:$0xf]
  %v39 = vld [vmem:[%s1 + $0x58] sm:$0xf]
  %v40 = vld [vmem:[%s1 + $0x5c] sm:$0xf]
  %v41 = vld [vmem:[%s2] sm:$0x1]
  %v43 = vlaneseq
  %v44 = vshrl.u32 %v43, 7
  %v45 = vsub.s32 0, %v44
  %v46 = vrot.slane %v41, %v45
  %v50 = vunpack.c.l.b16 %v15
  %v51 = vunpack.c.h.b16 %v15
  %v52 = vunpack.c.l.b16 %v16
  %v53 = vunpack.c.h.b16 %v16
  %v54 = vpack.c.b16 %v52, %v50
  %v55 = vpack.c.b16 %v53, %v51
  %v81 = vunpack.c.l.b16 %v17
  %v82 = vunpack.c.l.b16 %v18
  %v83 = vunpack.c.l.b16 %v19
  %v84 = vunpack.c.l.b16 %v20
  %v85 = vunpack.c.l.b16 %v21
  %v86 = vunpack.c.l.b16 %v22
  %v87 = vunpack.c.l.b16 %v23
  %v88 = vunpack.c.l.b16 %v24
  %v89 = vunpack.c.l.b16 %v25
  %v90 = vunpack.c.l.b16 %v26
  %v91 = vunpack.c.l.b16 %v27
  %v92 = vunpack.c.l.b16 %v28
  %v93 = vunpack.c.l.b16 %v29
  %v94 = vunpack.c.l.b16 %v30
  %v95 = vunpack.c.l.b16 %v31
  %v96 = vunpack.c.l.b16 %v32
  %v97 = vunpack.c.l.b16 %v33
  %v98 = vunpack.c.l.b16 %v34
  %v99 = vunpack.c.l.b16 %v35
  %v100 = vunpack.c.l.b16 %v36
  %v101 = vunpack.c.l.b16 %v37
  %v102 = vunpack.c.l.b16 %v38
  %v103 = vunpack.c.l.b16 %v39
  %v104 = vunpack.c.l.b16 %v40
  %v105 = vpack.c.b16 %v82, %v81
  %v106 = vpack.c.b16 %v84, %v83
  %v107 = vpack.c.b16 %v86, %v85
  %v108 = vpack.c.b16 %v88, %v87
  %v109 = vpack.c.b16 %v90, %v89
  %v110 = vpack.c.b16 %v92, %v91
  %v111 = vpack.c.b16 %v94, %v93
  %v112 = vpack.c.b16 %v96, %v95
  %v113 = vpack.c.b16 %v98, %v97
  %v114 = vpack.c.b16 %v100, %v99
  %v115 = vpack.c.b16 %v102, %v101
  %v116 = vpack.c.b16 %v104, %v103
  %vm129 = vcmask 523264
  %v131 = vsel %vm129, %v55, 0
  %133 = vmatprep.subr.bf16.mxu0 0
  %134 = vmatpush1.bf16.msra.mxu0 %v112
  %135 = vmatprep.subr.bf16.mxu0 0
  %136 = vmatpush1.bf16.msra.mxu0 %v111
  %137 = vmatprep.subr.bf16.mxu0 0
  %138 = vmatpush1.bf16.msra.mxu0 %v110
  %139 = vmatprep.subr.bf16.mxu0 0
  %140 = vmatpush1.bf16.msra.mxu0 %v109
  %141 = vmatprep.subr.bf16.mxu0 0
  %142 = vmatpush1.bf16.msra.mxu0 %v108
  %143 = vmatprep.subr.bf16.mxu0 0
  %144 = vmatpush1.bf16.msra.mxu0 %v107
  %145 = vmatprep.subr.bf16.mxu0 0
  %146 = vmatpush1.bf16.msra.mxu0 %v106
  %147 = vmatprep.subr.bf16.mxu0 0
  %148 = vmatpush1.bf16.msra.mxu0 %v105
  %149 = vmatprep.subr.bf16.mxu0 0
  %150 = vmatpush2.bf16.msra.mxu0 0
  %151 = vmatprep.subr.bf16.mxu0 0
  %152 = vmatpush2.bf16.msra.mxu0 0
  %153 = vmatprep.subr.bf16.mxu0 0
  %154 = vmatpush2.bf16.msra.mxu0 0
  %155 = vmatprep.subr.bf16.mxu0 0
  %156 = vmatpush2.bf16.msra.mxu0 0
  %157 = vmatprep.subr.bf16.mxu0 0
  %158 = vmatpush2.bf16.msra.mxu0 %v116
  %159 = vmatprep.subr.bf16.mxu0 0
  %160 = vmatpush2.bf16.msra.mxu0 %v115
  %161 = vmatprep.subr.bf16.mxu0 0
  %162 = vmatpush2.bf16.msra.mxu0 %v114
  %163 = vmatprep.subr.bf16.mxu0 0
  %164 = vmatpush2.bf16.msra.mxu0 %v113
  %165 = vmatprep.mubr.bf16.mxu0 %v131
  %166 = vmatmul.mubr.bf16.gmra.mxu0 %v54
  %v167 = vpop.f32.mrf.mxu0
  %v168 = vadd.f32 %v46, %v167
  %v169 = vpop.f32.mrf.mxu0
  %v170 = vpop.f32.mrf.mxu0
  %v171 = vadd.f32 %v46, %v170
  %v172 = vpop.f32.mrf.mxu0
  %173 = vdwg.mxu0
  %174 = vst [vmem:[%s3] sm:$0xff] %v168
  %175 = vst [vmem:[%s3 + $0x8] sm:$0xff] %v171
  // Predicated region
  $region14: #{vision_encoder_forward.1} parent=0 // pred_check
    _
  $region15: #{vision_encoder_forward.1} parent=0 // pred_check_branch
    %177 = sbr.rel (0) target = $region17
  $region16: #{vision_encoder_forward.1} parent=0 // pred_region
    _
  $region17: #{vision_encoder_forward.1} parent=0 // pred_fallthru
    _
  // Predicated region
  $region18: #{vision_encoder_forward.1} parent=0 // pred_check
    _
  $region19: #{vision_encoder_forward.1} parent=0 // pred_check_branch
    %179 = sbr.rel (0) target = $region21
  $region20: #{vision_encoder_forward.1} parent=0 // pred_region
    _
  $region21: #{vision_encoder_forward.1} parent=0 // pred_fallthru
    _

</llo_original>
